<compile_context>
chip_gen: v6e
topology: v6e:2x2x1
jax: 0.10.0
libtpu: 0.0.40
codegen_flags: <defaults>
</compile_context>

<pallas_src>
import jax
import jax.numpy as jnp
from jax.experimental import pallas as pl
from jax.experimental.pallas import tpu as pltpu


# ----------------------------------------------------------------------------
# One-shot (per-sequence) kernel: enc_comb = enc @ w_up_comb + b_up_comb
# where w_up_comb = w_up @ w_comb_a, b_up_comb = b_up @ w_comb_a are prepared
# once per model in the wrapper.
# ----------------------------------------------------------------------------
def encoder_combine_kernel(enc_ref, w_ref, b_ref, out_ref):
    B = enc_ref.shape[0]
    for b in range(B):   # runs once per sequence; B tiny & static
        out_ref[b] = (jnp.dot(enc_ref[b], w_ref[...],
                              preferred_element_type=jnp.float32)
                      + b_ref[...])                                      # (L, H)


def precompute_encoder_comb(fused_params, encoder_outputs):
    B, L, E = encoder_outputs.shape
    H = fused_params['w_up_comb'].shape[1]
    vmem = pl.BlockSpec(memory_space=pltpu.MemorySpace.VMEM)
    return pl.pallas_call(
        encoder_combine_kernel,
        out_shape=jax.ShapeDtypeStruct((B, L, H), jnp.float32),
        in_specs=[vmem, vmem, vmem],
        out_specs=vmem,
    )(encoder_outputs, fused_params['w_up_comb'], fused_params['b_up_comb'])


# ----------------------------------------------------------------------------
# Per-decode-step kernel.
# ----------------------------------------------------------------------------
def attn_decoder_step_kernel(
    tok_ref, emb_tbl_ref, hid_ref, enccomb_ref,
    w_emb_ref, w_hid_ref, b_attn_ref, b_comb_ref,
    w_ih_ref, b_ih_ref, b_hh_ref,
    w_out_ref, b_out_ref,
    out_ref, hidnew_ref, attn_ref,
):
    B, L, H = enccomb_ref.shape

    # Embedding lookup inside the kernel (token ids come from SMEM).
    # dropout(p=0.1) is identity at inference.
    emb = jnp.concatenate(
        [emb_tbl_ref[pl.ds(tok_ref[b], 1), :] for b in range(B)], axis=0
    ).astype(jnp.float32)                                                # (B, H)
    hid = hid_ref[...].astype(jnp.float32)                               # (B, H)

    # Fused matmuls sharing an LHS:
    #   emb @ [w_comb_e | w_attn_e]   and   hid @ [w_hh | w_attn_h]
    emb_proj = jnp.dot(emb, w_emb_ref[...],
                       preferred_element_type=jnp.float32)               # (B, H+L)
    hid_proj = jnp.dot(hid, w_hid_ref[...],
                       preferred_element_type=jnp.float32)               # (B, 3H+L)

    # attn(cat(embedded, hidden)) -> softmax over max_length
    logits = (emb_proj[:, H:H + L] + hid_proj[:, 3 * H:3 * H + L]
              + b_attn_ref[...])                                         # (B, L)
    m = jnp.max(logits, axis=-1, keepdims=True)
    e = jnp.exp(logits - m)
    attn = e * pl.reciprocal(jnp.sum(e, axis=-1, keepdims=True),
                             approx=True)                                # (B, L)

    # ctx = bmm(attn, enc_comb) done on the VPU/XLU (w_comb_a already folded
    # into enc_comb): transpose (B,L)->(L,B), per batch row a lane-broadcast
    # multiply against (L, H) followed by a sublane reduction.
    attn_t = jnp.transpose(attn)                                         # (L, B)
    ctx_rows = []
    for b in range(B):
        w_b = attn_t[:, b:b + 1]                                         # (L, 1)
        ctx_rows.append(jnp.sum(w_b * enccomb_ref[b], axis=0,
                                keepdims=True))                          # (1, H)
    ctx = jnp.concatenate(ctx_rows, axis=0)                              # (B, H)

    # attn_combine(cat(embedded, attn_applied)) + relu
    comb = emb_proj[:, 0:H] + ctx + b_comb_ref[...]                      # (B, H)
    x = jnp.maximum(comb, 0.0)

    # single-step GRU (PyTorch gate order: r, z, n)
    gi = jnp.dot(x, w_ih_ref[...],
                 preferred_element_type=jnp.float32) + b_ih_ref[...]     # (B, 3H)
    gh = hid_proj[:, 0:3 * H] + b_hh_ref[...]                            # (B, 3H)
    r = jax.nn.sigmoid(gi[:, 0:H] + gh[:, 0:H])
    z = jax.nn.sigmoid(gi[:, H:2 * H] + gh[:, H:2 * H])
    n = jnp.tanh(gi[:, 2 * H:3 * H] + r * gh[:, 2 * H:3 * H])
    h_new = (1.0 - z) * n + z * hid                                      # (B, H)

    # out projection + log_softmax over vocab
    lo = (jnp.dot(h_new, w_out_ref[...], preferred_element_type=jnp.float32)
          + b_out_ref[...])                                              # (B, V)
    mo = jnp.max(lo, axis=-1, keepdims=True)
    lse = mo + jnp.log(jnp.sum(jnp.exp(lo - mo), axis=-1, keepdims=True))

    out_ref[...] = lo - lse
    hidnew_ref[...] = h_new
    attn_ref[...] = attn


# ----------------------------------------------------------------------------
# Wrappers.
# ----------------------------------------------------------------------------
def prepare_fused_params(params):
    """Fuse weight columns & fold w_comb_a into the encoder path (once per model)."""
    H = params['embedding'].shape[1]
    w_attn_e, w_attn_h = params['w_attn'][:H], params['w_attn'][H:]
    w_comb_e, w_comb_a = params['w_comb'][:H], params['w_comb'][H:]
    fused = dict(params)
    fused['w_emb_fused'] = jnp.concatenate([w_comb_e, w_attn_e], axis=1)   # (H, H+L)
    fused['w_hid_fused'] = jnp.concatenate([params['w_hh'], w_attn_h],
                                           axis=1)                        # (H, 3H+L)
    # enc_comb path: (enc @ w_up + b_up) @ w_comb_a == enc @ (w_up @ w_comb_a)
    #                + (b_up @ w_comb_a). Computed once per model.
    # TODO(synk): E == H (no embedding_upscaling) branch would use
    #             w_up_comb = w_comb_a, b_up_comb = 0.
    fused['w_up_comb'] = jnp.dot(params['w_up'], w_comb_a,
                                 precision=jax.lax.Precision.HIGHEST)      # (E, H)
    fused['b_up_comb'] = jnp.dot(params['b_up'], w_comb_a,
                                 precision=jax.lax.Precision.HIGHEST)      # (1, H)
    return fused


def attn_decoder_step(fused_params, input_tokens, hidden, enc_comb):
    """Single decode step.  input_tokens (B,1) i32, hidden (1,B,H), enc_comb (B,L,H)."""
    B, L, H = enc_comb.shape
    V = fused_params['w_out'].shape[1]
    hid0 = hidden[0]                                   # num_layers == 1
    tokens = input_tokens[:, 0].astype(jnp.int32)      # squeeze T=1 step dim

    vmem = pl.BlockSpec(memory_space=pltpu.MemorySpace.VMEM)
    smem = pl.BlockSpec(memory_space=pltpu.MemorySpace.SMEM)

    out2, h_new, attn = pl.pallas_call(
        attn_decoder_step_kernel,
        out_shape=(
            jax.ShapeDtypeStruct((B, V), jnp.float32),
            jax.ShapeDtypeStruct((B, H), jnp.float32),
            jax.ShapeDtypeStruct((B, L), jnp.float32),
        ),
        in_specs=[smem] + [vmem] * 12,
        out_specs=(vmem, vmem, vmem),
    )(
        tokens, fused_params['embedding'], hid0, enc_comb,
        fused_params['w_emb_fused'], fused_params['w_hid_fused'],
        fused_params['b_attn'], fused_params['b_comb'],
        fused_params['w_ih'], fused_params['b_ih'], fused_params['b_hh'],
        fused_params['w_out'], fused_params['b_out'],
    )

    output = out2[:, None, :]       # (B, 1, V)   log_softmax outputs
    hidden_new = h_new[None]        # (1, B, H)
    attentions = attn[:, None, :]   # (B, 1, L)
    return output, hidden_new, attentions


def attn_decoder_forward(params, input_tokens, hidden, encoder_outputs):
    """Semantics of AttnDecoderRNN.forward (E != H branch, num_layers == 1)."""
    fused = prepare_fused_params(params)
    enc_comb = precompute_encoder_comb(fused, encoder_outputs)
    return attn_decoder_step(fused, input_tokens, hidden, enc_comb)


# ----------------------------------------------------------------------------
# Pure-JAX reference (for correctness check).
# ----------------------------------------------------------------------------
def reference_forward(params, input_tokens, hidden, encoder_outputs):
    H = params['embedding'].shape[1]
    emb = jnp.take(params['embedding'], input_tokens[:, 0], axis=0)
    hid = hidden[0]
    logits = jnp.concatenate([emb, hid], 1) @ params['w_attn'] + params['b_attn']
    attn = jax.nn.softmax(logits, axis=-1)
    enc_up = encoder_outputs @ params['w_up'] + params['b_up']
    attn_applied = jnp.einsum('bl,blh->bh', attn, enc_up)
    x = jax.nn.relu(jnp.concatenate([emb, attn_applied], 1) @ params['w_comb']
                    + params['b_comb'])
    gi = x @ params['w_ih'] + params['b_ih']
    gh = hid @ params['w_hh'] + params['b_hh']
    r = jax.nn.sigmoid(gi[:, :H] + gh[:, :H])
    z = jax.nn.sigmoid(gi[:, H:2 * H] + gh[:, H:2 * H])
    n = jnp.tanh(gi[:, 2 * H:] + r * gh[:, 2 * H:])
    h_new = (1.0 - z) * n + z * hid
    lo = h_new @ params['w_out'] + params['b_out']
    out = jax.nn.log_softmax(lo, axis=-1)
    return out[:, None, :], h_new[None], attn[:, None, :]


if __name__ == "__main__":
    # small shapes consistent with the module's forward
    B = 2            # batch
    H = 32           # hidden_size
    L = 10           # max_length
    V = 32           # output_size (vocab)
    E = 16           # encoder_embedding_dimension (!= H -> upscaling applied)

    key = jax.random.PRNGKey(0)
    keys = jax.random.split(key, 16)

    def lin(k, fan_in, shape):
        bound = 1.0 / float(fan_in) ** 0.5
        return jax.random.uniform(k, shape, jnp.float32, -bound, bound)

    params = {
        'embedding': jax.random.normal(keys[0], (V, H), jnp.float32),
        'w_attn':  lin(keys[1], 2 * H, (2 * H, L)),
        'b_attn':  lin(keys[2], 2 * H, (1, L)),
        'w_up':    lin(keys[3], E, (E, H)),
        'b_up':    lin(keys[4], E, (1, H)),
        'w_comb':  lin(keys[5], 2 * H, (2 * H, H)),
        'b_comb':  lin(keys[6], 2 * H, (1, H)),
        'w_ih':    lin(keys[7], H, (H, 3 * H)),
        'b_ih':    lin(keys[8], H, (1, 3 * H)),
        'w_hh':    lin(keys[9], H, (H, 3 * H)),
        'b_hh':    lin(keys[10], H, (1, 3 * H)),
        'w_out':   lin(keys[11], H, (H, V)),
        'b_out':   lin(keys[12], H, (1, V)),
    }

    input_tokens = jax.random.randint(keys[13], (B, 1), 0, V, dtype=jnp.int32)
    hidden = jax.random.normal(keys[14], (1, B, H), jnp.float32)
    encoder_outputs = jax.random.normal(keys[15], (B, L, E), jnp.float32)

    out, hid_new, attn = attn_decoder_forward(params, input_tokens, hidden,
                                              encoder_outputs)
    jax.block_until_ready((out, hid_new, attn))

    assert out.shape == (B, 1, V)
    assert hid_new.shape == (1, B, H)
    assert attn.shape == (B, 1, L)

    # numerical check against pure-JAX reference (approx reciprocal + weight
    # folding reassociation in-kernel -> loose tolerance)
    ref_out, ref_hid, ref_attn = reference_forward(params, input_tokens,
                                                   hidden, encoder_outputs)
    assert bool(jnp.allclose(out, ref_out, atol=2e-2, rtol=2e-2))
    assert bool(jnp.allclose(hid_new, ref_hid, atol=2e-2, rtol=2e-2))
    assert bool(jnp.allclose(attn, ref_attn, atol=2e-2, rtol=2e-2))

    print("KERNEL_OK")
</pallas_src>

<mosaic_0001>
module attributes {stable_mosaic.version = 11 : i64} {
  func.func @encoder_combine_kernel(%arg0: memref<2x10x16xf32, #tpu.memory_space<vmem>>, %arg1: memref<16x32xf32, #tpu.memory_space<vmem>>, %arg2: memref<1x32xf32, #tpu.memory_space<vmem>>, %arg3: memref<2x10x32xf32, #tpu.memory_space<vmem>>) attributes {dimension_semantics = [], scalar_prefetch = 0 : i64, scratch_operands = 0 : i64, tpu.core_type = #tpu.core_type<tc>} {
    %c0 = arith.constant 0 : index
    %c0_0 = arith.constant 0 : index
    %c0_1 = arith.constant 0 : index
    %0 = vector.load %arg0[%c0, %c0_0, %c0_1] : memref<2x10x16xf32, #tpu.memory_space<vmem>>, vector<1x10x16xf32>
    %1 = vector.shape_cast %0 : vector<1x10x16xf32> to vector<10x16xf32>
    %c0_2 = arith.constant 0 : index
    %c0_3 = arith.constant 0 : index
    %2 = vector.load %arg1[%c0_2, %c0_3] : memref<16x32xf32, #tpu.memory_space<vmem>>, vector<16x32xf32>
    %cst = arith.constant dense<0.000000e+00> : vector<10x32xf32>
    %3 = tpu.matmul %1, %2, %cst {dimension_numbers = #tpu.dot_dimension_numbers<[1], [0], [0], [1], [0, 0, 1, 1], [], []>} : vector<10x16xf32>, vector<16x32xf32>, vector<10x32xf32> -> vector<10x32xf32>
    %c0_4 = arith.constant 0 : index
    %c0_5 = arith.constant 0 : index
    %4 = vector.load %arg2[%c0_4, %c0_5] : memref<1x32xf32, #tpu.memory_space<vmem>>, vector<1x32xf32>
    %5 = vector.broadcast %4 : vector<1x32xf32> to vector<10x32xf32>
    %6 = arith.addf %3, %5 : vector<10x32xf32>
    %c0_6 = arith.constant 0 : index
    %c0_7 = arith.constant 0 : index
    %c0_8 = arith.constant 0 : index
    %7 = vector.load %arg3[%c0_6, %c0_7, %c0_8] : memref<2x10x32xf32, #tpu.memory_space<vmem>>, vector<1x10x32xf32>
    %8 = vector.shape_cast %7 : vector<1x10x32xf32> to vector<10x32xf32>
    %9 = vector.shape_cast %6 : vector<10x32xf32> to vector<1x10x32xf32>
    tpu.vector_store %arg3[%c0_6, %c0_7, %c0_8], %9 {strides = array<i32>} : memref<2x10x32xf32, #tpu.memory_space<vmem>>, vector<1x10x32xf32>,
    %c1 = arith.constant 1 : index
    %c0_9 = arith.constant 0 : index
    %c0_10 = arith.constant 0 : index
    %10 = vector.load %arg0[%c1, %c0_9, %c0_10] : memref<2x10x16xf32, #tpu.memory_space<vmem>>, vector<1x10x16xf32>
    %11 = vector.shape_cast %10 : vector<1x10x16xf32> to vector<10x16xf32>
    %c0_11 = arith.constant 0 : index
    %c0_12 = arith.constant 0 : index
    %12 = vector.load %arg1[%c0_11, %c0_12] : memref<16x32xf32, #tpu.memory_space<vmem>>, vector<16x32xf32>
    %cst_13 = arith.constant dense<0.000000e+00> : vector<10x32xf32>
    %13 = tpu.matmul %11, %12, %cst_13 {dimension_numbers = #tpu.dot_dimension_numbers<[1], [0], [0], [1], [0, 0, 1, 1], [], []>} : vector<10x16xf32>, vector<16x32xf32>, vector<10x32xf32> -> vector<10x32xf32>
    %c0_14 = arith.constant 0 : index
    %c0_15 = arith.constant 0 : index
    %14 = vector.load %arg2[%c0_14, %c0_15] : memref<1x32xf32, #tpu.memory_space<vmem>>, vector<1x32xf32>
    %15 = vector.broadcast %14 : vector<1x32xf32> to vector<10x32xf32>
    %16 = arith.addf %13, %15 : vector<10x32xf32>
    %c1_16 = arith.constant 1 : index
    %c0_17 = arith.constant 0 : index
    %c0_18 = arith.constant 0 : index
    %17 = vector.load %arg3[%c1_16, %c0_17, %c0_18] : memref<2x10x32xf32, #tpu.memory_space<vmem>>, vector<1x10x32xf32>
    %18 = vector.shape_cast %17 : vector<1x10x32xf32> to vector<10x32xf32>
    %19 = vector.shape_cast %16 : vector<10x32xf32> to vector<1x10x32xf32>
    tpu.vector_store %arg3[%c1_16, %c0_17, %c0_18], %19 {strides = array<i32>} : memref<2x10x32xf32, #tpu.memory_space<vmem>>, vector<1x10x32xf32>,
    return
  }
}

</mosaic_0001>

<llo_original>
// kernel: tpu_custom_call.1
$region0: #{tpu_custom_call.1}
  #allocation0 [shape = 'u32[]', space=smem, size = 0x4, offset = 0x4, fixed_abs, tag = 'smem constant byte address 0x4 - core index']
  #allocation1 [shape = 'u32[144,128]{1,0:T(1,128)}', space=vmem, size = 0x12000, scoped, tag = 'internal scratch']
  %s0 = inlined_call_operand.vmem [shape: f32[2,10,16], index: 0, kind: input, shape index: {}]
  %s1 = inlined_call_operand.vmem [shape: f32[16,32], index: 1, kind: input, shape index: {}]
  %s2 = inlined_call_operand.vmem [shape: f32[1,32], index: 2, kind: input, shape index: {}]
  %s3 = inlined_call_operand.vmem [shape: f32[2,10,32], index: 3, kind: output, shape index: {}]
  %s4 = sld [smem:[#allocation0]]
  $region22: #{tpu_custom_call.1} parent=0
    _
  %s6 = ssub.s32 1, %s4
  %s7 = scalar_select 0, %s6, %s4
  // Predicated region
  $region2: #{tpu_custom_call.1} parent=0 // pred_check
    _
  $region3: #{tpu_custom_call.1} parent=0 // pred_check_branch
    %9 = sbr.rel (0) target = $region5
  $region4: #{tpu_custom_call.1} parent=0 // pred_region
    _
  $region5: #{tpu_custom_call.1} parent=0 // pred_fallthru
    _
  // Predicated region
  $region6: #{tpu_custom_call.1} parent=0 // pred_check
    _
  $region7: #{tpu_custom_call.1} parent=0 // pred_check_branch
    %11 = sbr.rel (0) target = $region9
  $region8: #{tpu_custom_call.1} parent=0 // pred_region
    _
  $region9: #{tpu_custom_call.1} parent=0 // pred_fallthru
    _
  // Predicated region
  $region10: #{tpu_custom_call.1} parent=0 // pred_check
    _
  $region11: #{tpu_custom_call.1} parent=0 // pred_check_branch
    %13 = sbr.rel (0) target = $region13
  $region12: #{tpu_custom_call.1} parent=0 // pred_region
    _
  $region13: #{tpu_custom_call.1} parent=0 // pred_fallthru
    _
  %v14 = vld [vmem:[%s0] sm:$0xff]
  %v15 = vld [vmem:[%s0 + $0x8] sm:$0x3]
  %v16 = vld [vmem:[%s1] sm:$0xff]
  %v17 = vld [vmem:[%s1 + $0x8] sm:$0xff]
  %v18 = vld [vmem:[%s2] sm:$0x1]
  %v20 = vlaneseq
  %v21 = vshrl.u32 %v20, 7
  %v22 = vsub.s32 0, %v21
  %v23 = vrot.slane %v18, %v22
  %vm25 = vcmask 130048
  %v27 = vsel %vm25, %v14, 0
  %v30 = vsel %vm25, %v15, 0
  %32 = vmatprep.subr.mxu0 0.0
  %33 = vmatpush1.msra.mxu0 0.0
  %34 = vmatprep.subr.mxu0 0.0
  %35 = vmatpush1.msra.mxu0 0.0
  %36 = vmatprep.subr.mxu0 0.0
  %37 = vmatpush1.msra.mxu0 0.0
  %38 = vmatprep.subr.mxu0 0.0
  %39 = vmatpush1.msra.mxu0 0.0
  %40 = vmatprep.subr.mxu0 0.0
  %41 = vmatpush1.msra.mxu0 0.0
  %42 = vmatprep.subr.mxu0 0.0
  %43 = vmatpush1.msra.mxu0 0.0
  %44 = vmatprep.subr.mxu0 0.0
  %45 = vmatpush1.msra.mxu0 0.0
  %46 = vmatprep.subr.mxu0 0.0
  %47 = vmatpush1.msra.mxu0 0.0
  %48 = vmatprep.subr.mxu0 0.0
  %49 = vmatpush1.msra.mxu0 0.0
  %50 = vmatprep.subr.mxu0 0.0
  %51 = vmatpush1.msra.mxu0 0.0
  %52 = vmatprep.subr.mxu0 0.0
  %53 = vmatpush1.msra.mxu0 0.0
  %54 = vmatprep.subr.mxu0 0.0
  %55 = vmatpush1.msra.mxu0 0.0
  %56 = vmatprep.subr.mxu0 0.0
  %57 = vmatpush1.msra.mxu0 0.0
  %58 = vmatprep.subr.mxu0 0.0
  %59 = vmatpush1.msra.mxu0 0.0
  %60 = vmatprep.subr.mxu0 0.0
  %61 = vmatpush1.msra.mxu0 %v17
  %62 = vmatprep.subr.mxu0 0.0
  %63 = vmatpush1.msra.mxu0 %v16
  %64 = vmatprep.subr.mxu0 0.0
  %65 = vmatpush2.msra.mxu0 0.0
  %66 = vmatprep.subr.mxu0 0.0
  %67 = vmatpush2.msra.mxu0 0.0
  %68 = vmatprep.subr.mxu0 0.0
  %69 = vmatpush2.msra.mxu0 0.0
  %70 = vmatprep.subr.mxu0 0.0
  %71 = vmatpush2.msra.mxu0 0.0
  %72 = vmatprep.subr.mxu0 0.0
  %73 = vmatpush2.msra.mxu0 0.0
  %74 = vmatprep.subr.mxu0 0.0
  %75 = vmatpush2.msra.mxu0 0.0
  %76 = vmatprep.subr.mxu0 0.0
  %77 = vmatpush2.msra.mxu0 0.0
  %78 = vmatprep.subr.mxu0 0.0
  %79 = vmatpush2.msra.mxu0 0.0
  %80 = vmatprep.subr.mxu0 0.0
  %81 = vmatpush2.msra.mxu0 0.0
  %82 = vmatprep.subr.mxu0 0.0
  %83 = vmatpush2.msra.mxu0 0.0
  %84 = vmatprep.subr.mxu0 0.0
  %85 = vmatpush2.msra.mxu0 0.0
  %86 = vmatprep.subr.mxu0 0.0
  %87 = vmatpush2.msra.mxu0 0.0
  %88 = vmatprep.subr.mxu0 0.0
  %89 = vmatpush2.msra.mxu0 0.0
  %90 = vmatprep.subr.mxu0 0.0
  %91 = vmatpush2.msra.mxu0 0.0
  %92 = vmatprep.subr.mxu0 0.0
  %93 = vmatpush2.msra.mxu0 0.0
  %94 = vmatprep.subr.mxu0 0.0
  %95 = vmatpush2.msra.mxu0 0.0
  %96 = vmatprep.mubr.f32.mxu0 0.0
  %97 = vmatmul.mubr.f32.gmra.mxu0 %v27
  %v98 = vpop.f32.mrf.mxu0
  %v99 = vadd.f32 %v23, %v98
  %v100 = vpop.f32.mrf.mxu0
  %101 = vmatprep.mubr.f32.mxu0 0.0
  %102 = vmatmul.mubr.f32.gmra.mxu0 %v30
  %v103 = vpop.f32.mrf.mxu0
  %v104 = vadd.f32 %v23, %v103
  %v105 = vpop.f32.mrf.mxu0
  %106 = vdwg.mxu0
  %vm107 = vcmask 261120
  %108 = vst.msk [vmem:[%s3] sm:$0xff] %vm107, %v99
  %vm109 = vcmask 254976
  %110 = vst.msk [vmem:[%s3 + $0x8] sm:$0x3] %vm109, %v104
  %s111 = scalar_lea.vmem %s0, 16
  %v112 = vld [vmem:[%s111] sm:$0xff]
  %v113 = vld [vmem:[%s111 + $0x8] sm:$0x3]
  %v114 = vld [vmem:[%s1] sm:$0xff]
  %v115 = vld [vmem:[%s1 + $0x8] sm:$0xff]
  %v116 = vld [vmem:[%s2] sm:$0x1]
  %v118 = vlaneseq
  %v119 = vshrl.u32 %v118, 7
  %v120 = vsub.s32 0, %v119
  %v121 = vrot.slane %v116, %v120
  %v124 = vsel %vm25, %v112, 0
  %v127 = vsel %vm25, %v113, 0
  %129 = vmatprep.subr.mxu0 0.0
  %130 = vmatpush1.msra.mxu0 0.0
  %131 = vmatprep.subr.mxu0 0.0
  %132 = vmatpush1.msra.mxu0 0.0
  %133 = vmatprep.subr.mxu0 0.0
  %134 = vmatpush1.msra.mxu0 0.0
  %135 = vmatprep.subr.mxu0 0.0
  %136 = vmatpush1.msra.mxu0 0.0
  %137 = vmatprep.subr.mxu0 0.0
  %138 = vmatpush1.msra.mxu0 0.0
  %139 = vmatprep.subr.mxu0 0.0
  %140 = vmatpush1.msra.mxu0 0.0
  %141 = vmatprep.subr.mxu0 0.0
  %142 = vmatpush1.msra.mxu0 0.0
  %143 = vmatprep.subr.mxu0 0.0
  %144 = vmatpush1.msra.mxu0 0.0
  %145 = vmatprep.subr.mxu0 0.0
  %146 = vmatpush1.msra.mxu0 0.0
  %147 = vmatprep.subr.mxu0 0.0
  %148 = vmatpush1.msra.mxu0 0.0
  %149 = vmatprep.subr.mxu0 0.0
  %150 = vmatpush1.msra.mxu0 0.0
  %151 = vmatprep.subr.mxu0 0.0
  %152 = vmatpush1.msra.mxu0 0.0
  %153 = vmatprep.subr.mxu0 0.0
  %154 = vmatpush1.msra.mxu0 0.0
  %155 = vmatprep.subr.mxu0 0.0
  %156 = vmatpush1.msra.mxu0 0.0
  %157 = vmatprep.subr.mxu0 0.0
  %158 = vmatpush1.msra.mxu0 %v115
  %159 = vmatprep.subr.mxu0 0.0
  %160 = vmatpush1.msra.mxu0 %v114
  %161 = vmatprep.subr.mxu0 0.0
  %162 = vmatpush2.msra.mxu0 0.0
  %163 = vmatprep.subr.mxu0 0.0
  %164 = vmatpush2.msra.mxu0 0.0
  %165 = vmatprep.subr.mxu0 0.0
  %166 = vmatpush2.msra.mxu0 0.0
  %167 = vmatprep.subr.mxu0 0.0
  %168 = vmatpush2.msra.mxu0 0.0
  %169 = vmatprep.subr.mxu0 0.0
  %170 = vmatpush2.msra.mxu0 0.0
  %171 = vmatprep.subr.mxu0 0.0
  %172 = vmatpush2.msra.mxu0 0.0
  %173 = vmatprep.subr.mxu0 0.0
  %174 = vmatpush2.msra.mxu0 0.0
  %175 = vmatprep.subr.mxu0 0.0
  %176 = vmatpush2.msra.mxu0 0.0
  %177 = vmatprep.subr.mxu0 0.0
  %178 = vmatpush2.msra.mxu0 0.0
  %179 = vmatprep.subr.mxu0 0.0
  %180 = vmatpush2.msra.mxu0 0.0
  %181 = vmatprep.subr.mxu0 0.0
  %182 = vmatpush2.msra.mxu0 0.0
  %183 = vmatprep.subr.mxu0 0.0
  %184 = vmatpush2.msra.mxu0 0.0
  %185 = vmatprep.subr.mxu0 0.0
  %186 = vmatpush2.msra.mxu0 0.0
  %187 = vmatprep.subr.mxu0 0.0
  %188 = vmatpush2.msra.mxu0 0.0
  %189 = vmatprep.subr.mxu0 0.0
  %190 = vmatpush2.msra.mxu0 0.0
  %191 = vmatprep.subr.mxu0 0.0
  %192 = vmatpush2.msra.mxu0 0.0
  %193 = vmatprep.mubr.f32.mxu0 0.0
  %194 = vmatmul.mubr.f32.gmra.mxu0 %v124
  %v195 = vpop.f32.mrf.mxu0
  %v196 = vadd.f32 %v121, %v195
  %v197 = vpop.f32.mrf.mxu0
  %198 = vmatprep.mubr.f32.mxu0 0.0
  %199 = vmatmul.mubr.f32.gmra.mxu0 %v127
  %v200 = vpop.f32.mrf.mxu0
  %v201 = vadd.f32 %v121, %v200
  %v202 = vpop.f32.mrf.mxu0
  %203 = vdwg.mxu0
  %s204 = scalar_lea.vmem %s3, 16
  %205 = vst.msk [vmem:[%s204] sm:$0xff] %vm107, %v196
  %206 = vst.msk [vmem:[%s204 + $0x8] sm:$0x3] %vm109, %v201
  // Predicated region
  $region14: #{tpu_custom_call.1} parent=0 // pred_check
    _
  $region15: #{tpu_custom_call.1} parent=0 // pred_check_branch
    %208 = sbr.rel (0) target = $region17
  $region16: #{tpu_custom_call.1} parent=0 // pred_region
    _
  $region17: #{tpu_custom_call.1} parent=0 // pred_fallthru
    _
  // Predicated region
  $region18: #{tpu_custom_call.1} parent=0 // pred_check
    _
  $region19: #{tpu_custom_call.1} parent=0 // pred_check_branch
    %210 = sbr.rel (0) target = $region21
  $region20: #{tpu_custom_call.1} parent=0 // pred_region
    _
  $region21: #{tpu_custom_call.1} parent=0 // pred_fallthru
    _

</llo_original>
